<compile_context>
chip_gen: v5e
topology: v5e:2x2
jax: 0.10.0
libtpu: 0.0.40
codegen_flags: <defaults>
</compile_context>

<pallas_src>
import jax
import jax.numpy as jnp
from jax import lax
from jax.experimental import pallas as pl
from jax.experimental.pallas import tpu as pltpu


def _attention_unit_kernel(q_ref, u_ref, wq_ref, wu_ref, wqu_ref, b1_ref,
                           w2_ref, b2_ref, w3_ref, b3_ref, out_ref):
    q = q_ref[0]                      # (1, E)       query of this batch
    u = u_ref[0]                      # (T_tile, E)  user-behavior rows

    # DIN feature construction folded into per-batch weights (no concat):
    #   x @ W1 + b1 == u @ (Wu + diag(q) Wqu) + (q @ Wq + b1)
    w1b = wu_ref[...] + wqu_ref[...] * q                                   # (H1, E)
    bias1 = jnp.sum(wq_ref[...] * q, axis=1, keepdims=True) + b1_ref[...]  # (H1, 1)

    # layer 1: contract E of (H1, E) with E of (T_tile, E) -> (H1, T_tile)
    # (rhs-transposed matmul keeps rows on the lane axis; no transpose op needed)
    nt = (((1,), (1,)), ((), ()))
    h = lax.dot_general(w1b, u, nt, preferred_element_type=jnp.float32) + bias1
    h = jax.nn.sigmoid(h)

    # layer 2: (H2, H1) @ (H1, T_tile) -> (H2, T_tile)
    h = jnp.dot(w2_ref[...], h, preferred_element_type=jnp.float32) + b2_ref[...]
    h = jax.nn.sigmoid(h)

    # final dense: (1, H2) @ (H2, T_tile) -> (1, T_tile)  (lane-dense output row)
    out_ref[0] = (jnp.dot(w3_ref[...], h, preferred_element_type=jnp.float32)
                  + b3_ref[...])


def attention_unit(query, user_behavior, params, *, t_tile=512):
    """query: (B,1,E) f32, user_behavior: (B,T,E) f32 -> (B,T,1) f32."""
    w1, b1, w2, b2, w3, b3 = params
    B, one, E = query.shape
    assert one == 1
    _, T, E2 = user_behavior.shape
    assert E2 == E
    in_dim, H1 = w1.shape
    assert in_dim == 4 * E
    H2 = w2.shape[1]

    f32 = jnp.float32
    query = query.astype(f32)                      # (B, 1, E) -- never broadcast over T
    user_behavior = user_behavior.astype(f32)

    # ---- one-time weight folding (removes the in-kernel [q,u,q-u,q*u] concat) ----
    A = w1[0 * E:1 * E]
    Bm = w1[1 * E:2 * E]
    C = w1[2 * E:3 * E]
    D = w1[3 * E:4 * E]
    wq_t = (A + C).T.astype(f32)                   # (H1, E)
    wu_t = (Bm - C).T.astype(f32)                  # (H1, E)
    wqu_t = D.T.astype(f32)                        # (H1, E)
    b1_c = b1.astype(f32).reshape(H1, 1)
    w2_t = w2.astype(f32).T                        # (H2, H1)
    b2_c = b2.astype(f32).reshape(H2, 1)
    w3_t = w3.astype(f32).reshape(H2, 1).T         # (1, H2)
    b3_c = b3.astype(f32).reshape(1, 1)

    # ---- tile the T axis; zero-pad the tail (sliced off afterwards) ----
    if T <= t_tile:
        T_tile, T_pad = T, T
        u_in = user_behavior
    else:
        T_tile = max(128, (t_tile // 128) * 128)   # keep output blocks lane-aligned
        n_t = -(-T // T_tile)
        T_pad = n_t * T_tile
        u_in = jnp.pad(user_behavior, ((0, 0), (0, T_pad - T), (0, 0)))
    grid = (B, T_pad // T_tile)

    full2 = lambda r, c: pl.BlockSpec((r, c), lambda b, t: (0, 0))  # resident weights

    out = pl.pallas_call(
        _attention_unit_kernel,
        out_shape=jax.ShapeDtypeStruct((B, 1, T_pad), f32),
        grid=grid,
        in_specs=[
            pl.BlockSpec((1, 1, E), lambda b, t: (b, 0, 0)),       # query (per batch)
            pl.BlockSpec((1, T_tile, E), lambda b, t: (b, t, 0)),  # behavior tile
            full2(H1, E),    # Wq^T
            full2(H1, E),    # Wu^T
            full2(H1, E),    # Wqu^T
            full2(H1, 1),    # b1
            full2(H2, H1),   # W2^T
            full2(H2, 1),    # b2
            full2(1, H2),    # w3^T
            full2(1, 1),     # b3
        ],
        out_specs=pl.BlockSpec((1, 1, T_tile), lambda b, t: (b, 0, t)),
        compiler_params=pltpu.CompilerParams(
            dimension_semantics=("parallel", "parallel")),
    )(query, u_in, wq_t, wu_t, wqu_t, b1_c, w2_t, b2_c, w3_t, b3_c)

    # (B, 1, T_pad) -> (B, T, 1): slice the padded tail, pure reshape (no data movement)
    return out[:, 0, :T, None]


def init_params(key, embedding_dim=4, hidden_units=(64, 32)):
    """Deterministic synthetic params matching the module's shapes.

    DNN(inputs_dim=4*E, hidden_units=(64,32), init_std=1) -> normal(std=1)
    weights, zero biases; final nn.Linear(hidden_units[-1], 1).
    """
    in_dim = 4 * embedding_dim
    h1, h2 = hidden_units
    k1, k2, k3 = jax.random.split(key, 3)
    w1 = jax.random.normal(k1, (in_dim, h1), jnp.float32)
    b1 = jnp.zeros((1, h1), jnp.float32)
    w2 = jax.random.normal(k2, (h1, h2), jnp.float32)
    b2 = jnp.zeros((1, h2), jnp.float32)
    w3 = jax.random.normal(k3, (h2, 1), jnp.float32) * 0.1
    b3 = jnp.zeros((1, 1), jnp.float32)
    return (w1, b1, w2, b2, w3, b3)


def _reference(query, user_behavior, params):
    """Pure-JAX reference of the PyTorch forward (concat form) for checking."""
    w1, b1, w2, b2, w3, b3 = params
    B, _, E = query.shape
    T = user_behavior.shape[1]
    q = jnp.broadcast_to(query, (B, T, E))
    x = jnp.concatenate([q, user_behavior, q - user_behavior,
                         q * user_behavior], axis=-1)
    h = jax.nn.sigmoid(x @ w1 + b1)
    h = jax.nn.sigmoid(h @ w2 + b2)
    return h @ w3 + b3


if __name__ == "__main__":
    key = jax.random.PRNGKey(0)
    kq, ku, kp, kq2, ku2 = jax.random.split(key, 5)

    # Primary small test: batch=2, T=8, embedding_dim=4, hidden=(64, 32).
    B, T, E = 2, 8, 4
    query = jax.random.normal(kq, (B, 1, E), jnp.float32)
    user_behavior = jax.random.normal(ku, (B, T, E), jnp.float32)
    params = init_params(kp, embedding_dim=E, hidden_units=(64, 32))

    out = attention_unit(query, user_behavior, params)
    out = jax.block_until_ready(out)
    ref = _reference(query, user_behavior, params)
    assert out.shape == (B, T, 1)
    assert jnp.allclose(out, ref, atol=1e-3, rtol=1e-3), "mismatch vs reference"

    # Second test exercises the T-tiling + zero-padded tail path (T=300, tile=128).
    T2 = 300
    query2 = jax.random.normal(kq2, (B, 1, E), jnp.float32)
    user_behavior2 = jax.random.normal(ku2, (B, T2, E), jnp.float32)
    out2 = attention_unit(query2, user_behavior2, params, t_tile=128)
    out2 = jax.block_until_ready(out2)
    ref2 = _reference(query2, user_behavior2, params)
    assert out2.shape == (B, T2, 1)
    assert jnp.allclose(out2, ref2, atol=1e-3, rtol=1e-3), "mismatch vs reference (tiled)"

    print("KERNEL_OK")
</pallas_src>

<mosaic_0001>
module attributes {stable_mosaic.version = 11 : i64} {
  func.func @_attention_unit_kernel(%arg0: i32, %arg1: i32, %arg2: memref<1x1x4xf32, #tpu.memory_space<vmem>>, %arg3: memref<1x8x4xf32, #tpu.memory_space<vmem>>, %arg4: memref<64x4xf32, #tpu.memory_space<vmem>>, %arg5: memref<64x4xf32, #tpu.memory_space<vmem>>, %arg6: memref<64x4xf32, #tpu.memory_space<vmem>>, %arg7: memref<64x1xf32, #tpu.memory_space<vmem>>, %arg8: memref<32x64xf32, #tpu.memory_space<vmem>>, %arg9: memref<32x1xf32, #tpu.memory_space<vmem>>, %arg10: memref<1x32xf32, #tpu.memory_space<vmem>>, %arg11: memref<1x1xf32, #tpu.memory_space<vmem>>, %arg12: memref<1x1x8xf32, #tpu.memory_space<vmem>>) attributes {dimension_semantics = [#tpu.dimension_semantics<parallel>, #tpu.dimension_semantics<parallel>], iteration_bounds = array<i64: 2, 1>, scalar_prefetch = 0 : i64, scratch_operands = 0 : i64, tpu.core_type = #tpu.core_type<tc>, window_params = [{transform_indices = @transform_0, window_bounds = array<i64: 1, 1, 4>}, {transform_indices = @transform_1, window_bounds = array<i64: 1, 8, 4>}, {pipeline_mode = #tpu.pipeline_mode<synchronous>, transform_indices = @transform_2, window_bounds = array<i64: 64, 4>}, {pipeline_mode = #tpu.pipeline_mode<synchronous>, transform_indices = @transform_3, window_bounds = array<i64: 64, 4>}, {pipeline_mode = #tpu.pipeline_mode<synchronous>, transform_indices = @transform_4, window_bounds = array<i64: 64, 4>}, {pipeline_mode = #tpu.pipeline_mode<synchronous>, transform_indices = @transform_5, window_bounds = array<i64: 64, 1>}, {pipeline_mode = #tpu.pipeline_mode<synchronous>, transform_indices = @transform_6, window_bounds = array<i64: 32, 64>}, {pipeline_mode = #tpu.pipeline_mode<synchronous>, transform_indices = @transform_7, window_bounds = array<i64: 32, 1>}, {pipeline_mode = #tpu.pipeline_mode<synchronous>, transform_indices = @transform_8, window_bounds = array<i64: 1, 32>}, {pipeline_mode = #tpu.pipeline_mode<synchronous>, transform_indices = @transform_9, window_bounds = array<i64: 1, 1>}, {transform_indices = @transform_10, window_bounds = array<i64: 1, 1, 8>}]} {
    %c0 = arith.constant 0 : index
    %c0_0 = arith.constant 0 : index
    %c0_1 = arith.constant 0 : index
    %0 = vector.load %arg2[%c0, %c0_0, %c0_1] : memref<1x1x4xf32, #tpu.memory_space<vmem>>, vector<1x1x4xf32>
    %1 = vector.shape_cast %0 : vector<1x1x4xf32> to vector<1x4xf32>
    %c0_2 = arith.constant 0 : index
    %c0_3 = arith.constant 0 : index
    %c0_4 = arith.constant 0 : index
    %2 = vector.load %arg3[%c0_2, %c0_3, %c0_4] : memref<1x8x4xf32, #tpu.memory_space<vmem>>, vector<1x8x4xf32>
    %3 = vector.shape_cast %2 : vector<1x8x4xf32> to vector<8x4xf32>
    %c0_5 = arith.constant 0 : index
    %c0_6 = arith.constant 0 : index
    %4 = vector.load %arg5[%c0_5, %c0_6] : memref<64x4xf32, #tpu.memory_space<vmem>>, vector<64x4xf32>
    %c0_7 = arith.constant 0 : index
    %c0_8 = arith.constant 0 : index
    %5 = vector.load %arg6[%c0_7, %c0_8] : memref<64x4xf32, #tpu.memory_space<vmem>>, vector<64x4xf32>
    %6 = vector.broadcast %1 : vector<1x4xf32> to vector<64x4xf32>
    %7 = arith.mulf %5, %6 : vector<64x4xf32>
    %8 = arith.addf %4, %7 : vector<64x4xf32>
    %c0_9 = arith.constant 0 : index
    %c0_10 = arith.constant 0 : index
    %9 = vector.load %arg4[%c0_9, %c0_10] : memref<64x4xf32, #tpu.memory_space<vmem>>, vector<64x4xf32>
    %10 = vector.broadcast %1 : vector<1x4xf32> to vector<64x4xf32>
    %11 = arith.mulf %9, %10 : vector<64x4xf32>
    %cst = arith.constant dense<0.000000e+00> : vector<64xf32>
    %12 = vector.multi_reduction <add>, %11, %cst [1] : vector<64x4xf32> to vector<64xf32>
    %13 = vector.shape_cast %12 : vector<64xf32> to vector<64x1xf32>
    %c0_11 = arith.constant 0 : index
    %c0_12 = arith.constant 0 : index
    %14 = vector.load %arg7[%c0_11, %c0_12] : memref<64x1xf32, #tpu.memory_space<vmem>>, vector<64x1xf32>
    %15 = arith.addf %13, %14 : vector<64x1xf32>
    %cst_13 = arith.constant dense<0.000000e+00> : vector<64x8xf32>
    %16 = tpu.matmul %8, %3, %cst_13 {dimension_numbers = #tpu.dot_dimension_numbers<[1], [1], [0], [0], [0, 0, 1, 0], [], []>} : vector<64x4xf32>, vector<8x4xf32>, vector<64x8xf32> -> vector<64x8xf32>
    %17 = vector.broadcast %15 : vector<64x1xf32> to vector<64x8xf32>
    %18 = arith.addf %16, %17 : vector<64x8xf32>
    %19 = arith.negf %18 : vector<64x8xf32>
    %20 = math.exp %19 : vector<64x8xf32>
    %cst_14 = arith.constant 1.000000e+00 : f32
    %21 = vector.broadcast %cst_14 : f32 to vector<64x8xf32>
    %22 = arith.addf %21, %20 : vector<64x8xf32>
    %23 = arith.divf %21, %22 : vector<64x8xf32>
    %c0_15 = arith.constant 0 : index
    %c0_16 = arith.constant 0 : index
    %24 = vector.load %arg8[%c0_15, %c0_16] : memref<32x64xf32, #tpu.memory_space<vmem>>, vector<32x64xf32>
    %cst_17 = arith.constant dense<0.000000e+00> : vector<32x8xf32>
    %25 = tpu.matmul %24, %23, %cst_17 {dimension_numbers = #tpu.dot_dimension_numbers<[1], [0], [0], [1], [0, 0, 1, 1], [], []>} : vector<32x64xf32>, vector<64x8xf32>, vector<32x8xf32> -> vector<32x8xf32>
    %c0_18 = arith.constant 0 : index
    %c0_19 = arith.constant 0 : index
    %26 = vector.load %arg9[%c0_18, %c0_19] : memref<32x1xf32, #tpu.memory_space<vmem>>, vector<32x1xf32>
    %27 = vector.broadcast %26 : vector<32x1xf32> to vector<32x8xf32>
    %28 = arith.addf %25, %27 : vector<32x8xf32>
    %29 = arith.negf %28 : vector<32x8xf32>
    %30 = math.exp %29 : vector<32x8xf32>
    %cst_20 = arith.constant 1.000000e+00 : f32
    %31 = vector.broadcast %cst_20 : f32 to vector<32x8xf32>
    %32 = arith.addf %31, %30 : vector<32x8xf32>
    %33 = arith.divf %31, %32 : vector<32x8xf32>
    %c0_21 = arith.constant 0 : index
    %c0_22 = arith.constant 0 : index
    %34 = vector.load %arg10[%c0_21, %c0_22] : memref<1x32xf32, #tpu.memory_space<vmem>>, vector<1x32xf32>
    %cst_23 = arith.constant dense<0.000000e+00> : vector<1x8xf32>
    %35 = tpu.matmul %34, %33, %cst_23 {dimension_numbers = #tpu.dot_dimension_numbers<[1], [0], [0], [1], [0, 0, 1, 1], [], []>} : vector<1x32xf32>, vector<32x8xf32>, vector<1x8xf32> -> vector<1x8xf32>
    %c0_24 = arith.constant 0 : index
    %c0_25 = arith.constant 0 : index
    %36 = vector.load %arg11[%c0_24, %c0_25] : memref<1x1xf32, #tpu.memory_space<vmem>>, vector<1x1xf32>
    %37 = vector.broadcast %36 : vector<1x1xf32> to vector<1x8xf32>
    %38 = arith.addf %35, %37 : vector<1x8xf32>
    %c0_26 = arith.constant 0 : index
    %c0_27 = arith.constant 0 : index
    %c0_28 = arith.constant 0 : index
    %39 = vector.load %arg12[%c0_26, %c0_27, %c0_28] : memref<1x1x8xf32, #tpu.memory_space<vmem>>, vector<1x1x8xf32>
    %40 = vector.shape_cast %39 : vector<1x1x8xf32> to vector<1x8xf32>
    %41 = vector.shape_cast %38 : vector<1x8xf32> to vector<1x1x8xf32>
    tpu.vector_store %arg12[%c0_26, %c0_27, %c0_28], %41 {strides = array<i32>} : memref<1x1x8xf32, #tpu.memory_space<vmem>>, vector<1x1x8xf32>,
    return
  }
  func.func @transform_0(%arg0: i32, %arg1: i32) -> (i32, i32, i32) {
    %c0_i32 = arith.constant 0 : i32
    %c0_i32_0 = arith.constant 0 : i32
    %c0_i32_1 = arith.constant 0 : i32
    return %arg0, %c0_i32, %c0_i32_0 : i32, i32, i32
  }
  func.func @transform_1(%arg0: i32, %arg1: i32) -> (i32, i32, i32) {
    %c0_i32 = arith.constant 0 : i32
    %c0_i32_0 = arith.constant 0 : i32
    return %arg0, %arg1, %c0_i32 : i32, i32, i32
  }
  func.func @transform_2(%arg0: i32, %arg1: i32) -> (i32, i32) {
    %c0_i32 = arith.constant 0 : i32
    %c0_i32_0 = arith.constant 0 : i32
    %c0_i32_1 = arith.constant 0 : i32
    return %c0_i32, %c0_i32_0 : i32, i32
  }
  func.func @transform_3(%arg0: i32, %arg1: i32) -> (i32, i32) {
    %c0_i32 = arith.constant 0 : i32
    %c0_i32_0 = arith.constant 0 : i32
    %c0_i32_1 = arith.constant 0 : i32
    return %c0_i32, %c0_i32_0 : i32, i32
  }
  func.func @transform_4(%arg0: i32, %arg1: i32) -> (i32, i32) {
    %c0_i32 = arith.constant 0 : i32
    %c0_i32_0 = arith.constant 0 : i32
    %c0_i32_1 = arith.constant 0 : i32
    return %c0_i32, %c0_i32_0 : i32, i32
  }
  func.func @transform_5(%arg0: i32, %arg1: i32) -> (i32, i32) {
    %c0_i32 = arith.constant 0 : i32
    %c0_i32_0 = arith.constant 0 : i32
    %c0_i32_1 = arith.constant 0 : i32
    return %c0_i32, %c0_i32_0 : i32, i32
  }
  func.func @transform_6(%arg0: i32, %arg1: i32) -> (i32, i32) {
    %c0_i32 = arith.constant 0 : i32
    %c0_i32_0 = arith.constant 0 : i32
    %c0_i32_1 = arith.constant 0 : i32
    return %c0_i32, %c0_i32_0 : i32, i32
  }
  func.func @transform_7(%arg0: i32, %arg1: i32) -> (i32, i32) {
    %c0_i32 = arith.constant 0 : i32
    %c0_i32_0 = arith.constant 0 : i32
    %c0_i32_1 = arith.constant 0 : i32
    return %c0_i32, %c0_i32_0 : i32, i32
  }
  func.func @transform_8(%arg0: i32, %arg1: i32) -> (i32, i32) {
    %c0_i32 = arith.constant 0 : i32
    %c0_i32_0 = arith.constant 0 : i32
    %c0_i32_1 = arith.constant 0 : i32
    return %c0_i32, %c0_i32_0 : i32, i32
  }
  func.func @transform_9(%arg0: i32, %arg1: i32) -> (i32, i32) {
    %c0_i32 = arith.constant 0 : i32
    %c0_i32_0 = arith.constant 0 : i32
    %c0_i32_1 = arith.constant 0 : i32
    return %c0_i32, %c0_i32_0 : i32, i32
  }
  func.func @transform_10(%arg0: i32, %arg1: i32) -> (i32, i32, i32) {
    %c0_i32 = arith.constant 0 : i32
    %c0_i32_0 = arith.constant 0 : i32
    return %arg0, %c0_i32, %arg1 : i32, i32, i32
  }
}

</mosaic_0001>

<llo_original>
// kernel: tpu_custom_call.1
$region0: #{tpu_custom_call.1}
  #allocation0 [shape = 'u32[]', space=smem, size = 0x4, offset = 0x4, fixed_abs, tag = 'smem constant byte address 0x4 - core index']
  #allocation1 [shape = 'u32[72,128]{1,0:T(1,128)}', space=vmem, size = 0x9000, scoped, tag = 'internal scratch']
  #allocation2 [shape = 'f32[1,1]{1,0:T(1,128)S(1)}', space=vmem, size = 0x200, scoped, tag = 'scoped memory for tpu_custom_call.1']
  %s0 = inlined_call_operand.vmem [shape: f32[2,1,4], index: 0, kind: input, shape index: {}]
  %s1 = inlined_call_operand.vmem [shape: f32[2,8,4], index: 1, kind: input, shape index: {}]
  %s2 = inlined_call_operand.vmem [shape: f32[64,4], index: 2, kind: input, shape index: {}]
  %s3 = inlined_call_operand.vmem [shape: f32[64,4], index: 3, kind: input, shape index: {}]
  %s4 = inlined_call_operand.vmem [shape: f32[64,4], index: 4, kind: input, shape index: {}]
  %s5 = inlined_call_operand.vmem [shape: f32[64,1], index: 5, kind: input, shape index: {}]
  %s6 = inlined_call_operand.vmem [shape: f32[32,64], index: 6, kind: input, shape index: {}]
  %s7 = inlined_call_operand.vmem [shape: f32[32,1], index: 7, kind: input, shape index: {}]
  %s8 = inlined_call_operand.vmem [shape: f32[1,32], index: 8, kind: input, shape index: {}]
  %s9 = inlined_call_operand.<no memory space> [shape: f32[1,1], index: 9, kind: input, shape index: {}]
  %s10 = inlined_call_operand.hbm [shape: f32[2,1,8], index: 10, kind: output, shape index: {}]
  %s11 = sld [smem:[#allocation0]]
  $region73: #{tpu_custom_call.1} parent=0
    _
  %s13 = ssub.s32 1, %s11
  %s14 = scalar_select 0, %s13, %s11
  %v15 = vstv %s9
  %16 = vst [vmem:[#allocation2] sm:$0x1] %v15
  $region1: #{tpu_custom_call.1} parent=0
    #allocation3 [shape = 'u8[1024]{0}', space=vmem, size = 0x400, scoped, tag = 'output window, operand 0']
    #allocation4 [shape = 's32[2]{0}', space=sflag, size = 0x8, scoped, tag = 'scoped memory for tpu_custom_call.1']
    %17 = vsyncpa [#allocation4], 0
    %s18 = scalar_lea.sflag [#allocation4], 1
    %19 = vsyncpa %s18, 0
    loop: start=0, step=1, limit=4
    $region2: #{tpu_custom_call.1} parent=1 // loop_pre_header
      _
    $region3: #{tpu_custom_call.1} parent=1 // loop_header
      %s21 = sphi 0, %s25
      %p22 = scmp.ge.s32.totalorder %s21, 4
      %s28 = sphi 0, %s40
      %s29 = sphi 0, %s36
      %s30 = sphi 0, %s28
      %s31 = sphi 0, %s29
      %s32 = sphi 0, %s30
      %s33 = sphi 0, %s31
      %s43 = sphi 0, %s45
      %s46 = sphi 0, %s43
      %s47 = sphi 0, %s46
      %s63 = sphi 0, %s47
      %s71 = sphi 0, %s73
      %s74 = sphi 0, %s71
      %s75 = sphi 0, %s74
      %s91 = sphi 0, %s75
      %s95 = sphi 0, %s95
      %s97 = sphi 0, %s95
      %s98 = sphi 0, %s97
      %s112 = sphi 0, %s98
      %s116 = sphi 0, %s116
      %s118 = sphi 0, %s116
      %s119 = sphi 0, %s118
      %s133 = sphi 0, %s119
      %s137 = sphi 0, %s137
      %s139 = sphi 0, %s137
      %s140 = sphi 0, %s139
      %s154 = sphi 0, %s140
      %s158 = sphi 0, %s158
      %s160 = sphi 0, %s158
      %s161 = sphi 0, %s160
      %s175 = sphi 0, %s161
      %s179 = sphi 0, %s179
      %s181 = sphi 0, %s179
      %s182 = sphi 0, %s181
      %s196 = sphi 0, %s182
      %s200 = sphi 0, %s200
      %s202 = sphi 0, %s200
      %s203 = sphi 0, %s202
      %s217 = sphi 0, %s203
      %s221 = sphi 0, %s221
      %s223 = sphi 0, %s221
      %s224 = sphi 0, %s223
      %s238 = sphi 0, %s224
      %s242 = sphi 0, %s242
      %s244 = sphi 0, %s242
      %s245 = sphi 0, %s244
      %s259 = sphi 0, %s245
      %s267 = sphi 0, %s269
      %s270 = sphi 0, %s267
      %s271 = sphi 0, %s270
      %s287 = sphi 0, %s271
    $region4: #{tpu_custom_call.1} parent=1 // loop_header_branch
      %24 = sbr.rel (%p22) target = $region8
    $region5: #{tpu_custom_call.1} parent=1 // loop_body
      %s26 = ssub.s32 %s21, 1
      %s27 = ssub.s32 %s21, 2
      %s34 = sadd.s32 1, %s29
      %p35 = scmp.ge.s32.totalorder %s34, 1
      %s36 = scalar_select %p35, 0, %s34
      %s37 = sadd.s32 1, %s28
      %s38 = scalar_select %p35, %s37, %s28
      %p39 = scmp.ge.s32.totalorder %s38, 2
      %s40 = scalar_select %p39, 0, %s38
      %s41 = ssub.s32 %s28, %s40
      %p42 = scmp.eq.s32.totalorder %s41, 0
      %s44 = sadd.s32 %s43, 1
      %s45 = scalar_select %p42, %s43, %s44
      %p48 = pneg %p42
      %p49 = scmp.eq.s32.totalorder %s21, 1
      %p50 = por %p48, %p49
      %p51 = scmp.ne.s32.totalorder %s43, %s46
      %p52 = scmp.eq.s32.totalorder %s21, 0
      %p53 = por %p51, %p52
      %p54 = scmp.ne.s32.totalorder %s43, %s46
      %p55 = scmp.eq.s32.totalorder %s26, 1
      %p56 = por %p54, %p55
      %p57 = scmp.ne.s32.totalorder %s46, %s47
      %p58 = scmp.eq.s32.totalorder %s26, 0
      %p59 = por %p57, %p58
      %p60 = scmp.ne.s32.totalorder %s46, %s47
      %p61 = scmp.eq.s32.totalorder %s27, 1
      %p62 = por %p60, %p61
      %p64 = scmp.ne.s32.totalorder %s47, %s63
      %p65 = scmp.eq.s32.totalorder %s27, 0
      %p66 = por %p64, %p65
      %s67 = ssub.s32 %s28, %s40
      %s68 = ssub.s32 %s29, %s36
      %s69 = sor.u32 %s67, %s68
      %p70 = scmp.eq.s32.totalorder %s69, 0
      %s72 = sadd.s32 %s71, 1
      %s73 = scalar_select %p70, %s71, %s72
      %p76 = pneg %p70
      %p77 = scmp.eq.s32.totalorder %s21, 1
      %p78 = por %p76, %p77
      %p79 = scmp.ne.s32.totalorder %s71, %s74
      %p80 = scmp.eq.s32.totalorder %s21, 0
      %p81 = por %p79, %p80
      %p82 = scmp.ne.s32.totalorder %s71, %s74
      %p83 = scmp.eq.s32.totalorder %s26, 1
      %p84 = por %p82, %p83
      %p85 = scmp.ne.s32.totalorder %s74, %s75
      %p86 = scmp.eq.s32.totalorder %s26, 0
      %p87 = por %p85, %p86
      %p88 = scmp.ne.s32.totalorder %s74, %s75
      %p89 = scmp.eq.s32.totalorder %s27, 1
      %p90 = por %p88, %p89
      %p92 = scmp.ne.s32.totalorder %s75, %s91
      %p93 = scmp.eq.s32.totalorder %s27, 0
      %p94 = por %p92, %p93
      %s96 = sadd.s32 %s95, 1
      %p99 = scmp.eq.s32.totalorder %s21, 1
      %p100 = scmp.ne.s32.totalorder %s95, %s97
      %p101 = scmp.eq.s32.totalorder %s21, 0
      %p102 = por %p100, %p101
      %p103 = scmp.ne.s32.totalorder %s95, %s97
      %p104 = scmp.eq.s32.totalorder %s26, 1
      %p105 = por %p103, %p104
      %p106 = scmp.ne.s32.totalorder %s97, %s98
      %p107 = scmp.eq.s32.totalorder %s26, 0
      %p108 = por %p106, %p107
      %p109 = scmp.ne.s32.totalorder %s97, %s98
      %p110 = scmp.eq.s32.totalorder %s27, 1
      %p111 = por %p109, %p110
      %p113 = scmp.ne.s32.totalorder %s98, %s112
      %p114 = scmp.eq.s32.totalorder %s27, 0
      %p115 = por %p113, %p114
      %s117 = sadd.s32 %s116, 1
      %p120 = scmp.eq.s32.totalorder %s21, 1
      %p121 = scmp.ne.s32.totalorder %s116, %s118
      %p122 = scmp.eq.s32.totalorder %s21, 0
      %p123 = por %p121, %p122
      %p124 = scmp.ne.s32.totalorder %s116, %s118
      %p125 = scmp.eq.s32.totalorder %s26, 1
      %p126 = por %p124, %p125
      %p127 = scmp.ne.s32.totalorder %s118, %s119
      %p128 = scmp.eq.s32.totalorder %s26, 0
      %p129 = por %p127, %p128
      %p130 = scmp.ne.s32.totalorder %s118, %s119
      %p131 = scmp.eq.s32.totalorder %s27, 1
      %p132 = por %p130, %p131
      %p134 = scmp.ne.s32.totalorder %s119, %s133
      %p135 = scmp.eq.s32.totalorder %s27, 0
      %p136 = por %p134, %p135
      %s138 = sadd.s32 %s137, 1
      %p141 = scmp.eq.s32.totalorder %s21, 1
      %p142 = scmp.ne.s32.totalorder %s137, %s139
      %p143 = scmp.eq.s32.totalorder %s21, 0
      %p144 = por %p142, %p143
      %p145 = scmp.ne.s32.totalorder %s137, %s139
      %p146 = scmp.eq.s32.totalorder %s26, 1
      %p147 = por %p145, %p146
      %p148 = scmp.ne.s32.totalorder %s139, %s140
      %p149 = scmp.eq.s32.totalorder %s26, 0
      %p150 = por %p148, %p149
      %p151 = scmp.ne.s32.totalorder %s139, %s140
      %p152 = scmp.eq.s32.totalorder %s27, 1
      %p153 = por %p151, %p152
      %p155 = scmp.ne.s32.totalorder %s140, %s154
      %p156 = scmp.eq.s32.totalorder %s27, 0
      %p157 = por %p155, %p156
      %s159 = sadd.s32 %s158, 1
      %p162 = scmp.eq.s32.totalorder %s21, 1
      %p163 = scmp.ne.s32.totalorder %s158, %s160
      %p164 = scmp.eq.s32.totalorder %s21, 0
      %p165 = por %p163, %p164
      %p166 = scmp.ne.s32.totalorder %s158, %s160
      %p167 = scmp.eq.s32.totalorder %s26, 1
      %p168 = por %p166, %p167
      %p169 = scmp.ne.s32.totalorder %s160, %s161
      %p170 = scmp.eq.s32.totalorder %s26, 0
      %p171 = por %p169, %p170
      %p172 = scmp.ne.s32.totalorder %s160, %s161
      %p173 = scmp.eq.s32.totalorder %s27, 1
      %p174 = por %p172, %p173
      %p176 = scmp.ne.s32.totalorder %s161, %s175
      %p177 = scmp.eq.s32.totalorder %s27, 0
      %p178 = por %p176, %p177
      %s180 = sadd.s32 %s179, 1
      %p183 = scmp.eq.s32.totalorder %s21, 1
      %p184 = scmp.ne.s32.totalorder %s179, %s181
      %p185 = scmp.eq.s32.totalorder %s21, 0
      %p186 = por %p184, %p185
      %p187 = scmp.ne.s32.totalorder %s179, %s181
      %p188 = scmp.eq.s32.totalorder %s26, 1
      %p189 = por %p187, %p188
      %p190 = scmp.ne.s32.totalorder %s181, %s182
      %p191 = scmp.eq.s32.totalorder %s26, 0
      %p192 = por %p190, %p191
      %p193 = scmp.ne.s32.totalorder %s181, %s182
      %p194 = scmp.eq.s32.totalorder %s27, 1
      %p195 = por %p193, %p194
      %p197 = scmp.ne.s32.totalorder %s182, %s196
      %p198 = scmp.eq.s32.totalorder %s27, 0
      %p199 = por %p197, %p198
      %s201 = sadd.s32 %s200, 1
      %p204 = scmp.eq.s32.totalorder %s21, 1
      %p205 = scmp.ne.s32.totalorder %s200, %s202
      %p206 = scmp.eq.s32.totalorder %s21, 0
      %p207 = por %p205, %p206
      %p208 = scmp.ne.s32.totalorder %s200, %s202
      %p209 = scmp.eq.s32.totalorder %s26, 1
      %p210 = por %p208, %p209
      %p211 = scmp.ne.s32.totalorder %s202, %s203
      %p212 = scmp.eq.s32.totalorder %s26, 0
      %p213 = por %p211, %p212
      %p214 = scmp.ne.s32.totalorder %s202, %s203
      %p215 = scmp.eq.s32.totalorder %s27, 1
      %p216 = por %p214, %p215
      %p218 = scmp.ne.s32.totalorder %s203, %s217
      %p219 = scmp.eq.s32.totalorder %s27, 0
      %p220 = por %p218, %p219
      %s222 = sadd.s32 %s221, 1
      %p225 = scmp.eq.s32.totalorder %s21, 1
      %p226 = scmp.ne.s32.totalorder %s221, %s223
      %p227 = scmp.eq.s32.totalorder %s21, 0
      %p228 = por %p226, %p227
      %p229 = scmp.ne.s32.totalorder %s221, %s223
      %p230 = scmp.eq.s32.totalorder %s26, 1
      %p231 = por %p229, %p230
      %p232 = scmp.ne.s32.totalorder %s223, %s224
      %p233 = scmp.eq.s32.totalorder %s26, 0
      %p234 = por %p232, %p233
      %p235 = scmp.ne.s32.totalorder %s223, %s224
      %p236 = scmp.eq.s32.totalorder %s27, 1
      %p237 = por %p235, %p236
      %p239 = scmp.ne.s32.totalorder %s224, %s238
      %p240 = scmp.eq.s32.totalorder %s27, 0
      %p241 = por %p239, %p240
      %s243 = sadd.s32 %s242, 1
      %p246 = scmp.eq.s32.totalorder %s21, 1
      %p247 = scmp.ne.s32.totalorder %s242, %s244
      %p248 = scmp.eq.s32.totalorder %s21, 0
      %p249 = por %p247, %p248
      %p250 = scmp.ne.s32.totalorder %s242, %s244
      %p251 = scmp.eq.s32.totalorder %s26, 1
      %p252 = por %p250, %p251
      %p253 = scmp.ne.s32.totalorder %s244, %s245
      %p254 = scmp.eq.s32.totalorder %s26, 0
      %p255 = por %p253, %p254
      %p256 = scmp.ne.s32.totalorder %s244, %s245
      %p257 = scmp.eq.s32.totalorder %s27, 1
      %p258 = por %p256, %p257
      %p260 = scmp.ne.s32.totalorder %s245, %s259
      %p261 = scmp.eq.s32.totalorder %s27, 0
      %p262 = por %p260, %p261
      %s263 = ssub.s32 %s28, %s40
      %s264 = ssub.s32 %s29, %s36
      %s265 = sor.u32 %s263, %s264
      %p266 = scmp.eq.s32.totalorder %s265, 0
      %s268 = sadd.s32 %s267, 1
      %s269 = scalar_select %p266, %s267, %s268
      %p272 = pneg %p266
      %p273 = scmp.eq.s32.totalorder %s21, 1
      %p274 = por %p272, %p273
      %p275 = scmp.ne.s32.totalorder %s267, %s270
      %p276 = scmp.eq.s32.totalorder %s21, 0
      %p277 = por %p275, %p276
      %p278 = scmp.ne.s32.totalorder %s267, %s270
      %p279 = scmp.eq.s32.totalorder %s26, 1
      %p280 = por %p278, %p279
      %p281 = scmp.ne.s32.totalorder %s270, %s271
      %p282 = scmp.eq.s32.totalorder %s26, 0
      %p283 = por %p281, %p282
      %p284 = scmp.ne.s32.totalorder %s270, %s271
      %p285 = scmp.eq.s32.totalorder %s27, 1
      %p286 = por %p284, %p285
      %p288 = scmp.ne.s32.totalorder %s271, %s287
      %p289 = scmp.eq.s32.totalorder %s27, 0
      %p290 = por %p288, %p289
      %p291 = scmp.le.s32.totalorder 1, %s21
      %p292 = scmp.lt.s32.totalorder %s21, 3
      %p293 = pnand %p291, %p292
      %p294 = pneg %p293
      // Predicated region
      $region9: #{tpu_custom_call.1} parent=5 // pred_check
        _
      $region10: #{tpu_custom_call.1} parent=5 // pred_check_branch
        %296 = sbr.rel (%p293) target = $region12
      $region11: #{tpu_custom_call.1} parent=5 // pred_region
        %s297 = ssub.s32 %s21, 1
        // Predicated region
        $region13: #{tpu_custom_call.1} parent=11 // pred_check
          %p298 = pneg %p108
        $region14: #{tpu_custom_call.1} parent=11 // pred_check_branch
          %300 = sbr.rel (%p298) target = $region16
        $region15: #{tpu_custom_call.1} parent=11 // pred_region
          _
        $region16: #{tpu_custom_call.1} parent=11 // pred_fallthru
          _
        // Predicated region
        $region17: #{tpu_custom_call.1} parent=11 // pred_check
          %p301 = pneg %p129
        $region18: #{tpu_custom_call.1} parent=11 // pred_check_branch
          %303 = sbr.rel (%p301) target = $region20
        $region19: #{tpu_custom_call.1} parent=11 // pred_region
          _
        $region20: #{tpu_custom_call.1} parent=11 // pred_fallthru
          _
        // Predicated region
        $region21: #{tpu_custom_call.1} parent=11 // pred_check
          %p304 = pneg %p150
        $region22: #{tpu_custom_call.1} parent=11 // pred_check_branch
          %306 = sbr.rel (%p304) target = $region24
        $region23: #{tpu_custom_call.1} parent=11 // pred_region
          _
        $region24: #{tpu_custom_call.1} parent=11 // pred_fallthru
          _
        // Predicated region
        $region25: #{tpu_custom_call.1} parent=11 // pred_check
          %p307 = pneg %p171
        $region26: #{tpu_custom_call.1} parent=11 // pred_check_branch
          %309 = sbr.rel (%p307) target = $region28
        $region27: #{tpu_custom_call.1} parent=11 // pred_region
          _
        $region28: #{tpu_custom_call.1} parent=11 // pred_fallthru
          _
        // Predicated region
        $region29: #{tpu_custom_call.1} parent=11 // pred_check
          %p310 = pneg %p192
        $region30: #{tpu_custom_call.1} parent=11 // pred_check_branch
          %312 = sbr.rel (%p310) target = $region32
        $region31: #{tpu_custom_call.1} parent=11 // pred_region
          _
        $region32: #{tpu_custom_call.1} parent=11 // pred_fallthru
          _
        // Predicated region
        $region33: #{tpu_custom_call.1} parent=11 // pred_check
          %p313 = pneg %p213
        $region34: #{tpu_custom_call.1} parent=11 // pred_check_branch
          %315 = sbr.rel (%p313) target = $region36
        $region35: #{tpu_custom_call.1} parent=11 // pred_region
          _
        $region36: #{tpu_custom_call.1} parent=11 // pred_fallthru
          _
        // Predicated region
        $region37: #{tpu_custom_call.1} parent=11 // pred_check
          %p316 = pneg %p234
        $region38: #{tpu_custom_call.1} parent=11 // pred_check_branch
          %318 = sbr.rel (%p316) target = $region40
        $region39: #{tpu_custom_call.1} parent=11 // pred_region
          _
        $region40: #{tpu_custom_call.1} parent=11 // pred_fallthru
          _
        // Predicated region
        $region41: #{tpu_custom_call.1} parent=11 // pred_check
          %p319 = pneg %p255
        $region42: #{tpu_custom_call.1} parent=11 // pred_check_branch
          %321 = sbr.rel (%p319) target = $region44
        $region43: #{tpu_custom_call.1} parent=11 // pred_region
          _
        $region44: #{tpu_custom_call.1} parent=11 // pred_fallthru
          _
      $region12: #{tpu_custom_call.1} parent=5 // pred_fallthru
        _
      %p322 = scmp.lt.s32.totalorder %s21, 2
      // Predicated region
      $region45: #{tpu_custom_call.1} parent=5 // pred_check
        %p323 = pneg %p322
      $region46: #{tpu_custom_call.1} parent=5 // pred_check_branch
        %325 = sbr.rel (%p323) target = $region48
      $region47: #{tpu_custom_call.1} parent=5 // pred_region
        // Predicated region
        $region49: #{tpu_custom_call.1} parent=47 // pred_check
          %p326 = pneg %p53
        $region50: #{tpu_custom_call.1} parent=47 // pred_check_branch
          %328 = sbr.rel (%p326) target = $region52
        $region51: #{tpu_custom_call.1} parent=47 // pred_region
          %p329 = scmp.lt.s32.totalorder %s28, 1
          %s330 = scalar_select %p329, %s28, 1
          %s331 = scalar_lea.vmem %s0, %s330
        $region52: #{tpu_custom_call.1} parent=47 // pred_fallthru
          _
        // Predicated region
        $region53: #{tpu_custom_call.1} parent=47 // pred_check
          %p332 = pneg %p81
        $region54: #{tpu_custom_call.1} parent=47 // pred_check_branch
          %334 = sbr.rel (%p332) target = $region56
        $region55: #{tpu_custom_call.1} parent=47 // pred_region
          %p335 = scmp.lt.s32.totalorder %s28, 1
          %s336 = scalar_select %p335, %s28, 1
          %p337 = scmp.lt.s32.totalorder %s29, 0
          %s338 = scalar_select %p337, %s29, 0
          %s339 = sadd.s32 %s338, %s336
          %s340 = smul.addr %s339, 8
          %s341 = scalar_lea.vmem %s1, %s340
        $region56: #{tpu_custom_call.1} parent=47 // pred_fallthru
          _
      $region48: #{tpu_custom_call.1} parent=5 // pred_fallthru
        _
      %p342 = scmp.le.s32.totalorder 1, %s21
      %p343 = scmp.lt.s32.totalorder %s21, 3
      %p344 = pnand %p342, %p343
      %p345 = pneg %p344
      // Predicated region
      $region57: #{tpu_custom_call.1} parent=5 // pred_check
        _
      $region58: #{tpu_custom_call.1} parent=5 // pred_check_branch
        %347 = sbr.rel (%p344) target = $region60
      $region59: #{tpu_custom_call.1} parent=5 // pred_region
        %s348 = ssub.s32 %s21, 1
        %p349 = scmp.lt.s32.totalorder %s30, 1
        %s350 = scalar_select %p349, %s30, 1
        %s351 = scalar_lea.vmem %s0, %s350
        %p352 = pneg %p59
        %p353 = pneg %p56
        %p354 = scmp.lt.s32.totalorder %s30, 1
        %s355 = scalar_select %p354, %s30, 1
        %p356 = scmp.lt.s32.totalorder %s31, 0
        %s357 = scalar_select %p356, %s31, 0
        %s358 = sadd.s32 %s357, %s355
        %s359 = smul.addr %s358, 8
        %s360 = scalar_lea.vmem %s1, %s359
        %p361 = pneg %p87
        %p362 = pneg %p84
        %p363 = pneg %p108
        %p364 = pneg %p105
        %p365 = pneg %p129
        %p366 = pneg %p126
        %p367 = pneg %p150
        %p368 = pneg %p147
        %p369 = pneg %p171
        %p370 = pneg %p168
        %p371 = pneg %p192
        %p372 = pneg %p189
        %p373 = pneg %p213
        %p374 = pneg %p210
        %p375 = pneg %p234
        %p376 = pneg %p231
        %p377 = pneg %p255
        %p378 = pneg %p252
        %p379 = pneg %p283
        %p380 = pneg %p280
        %s381 = sand.u32 %s270, 1
        %s382 = scalar_lea.sflag [#allocation4], %s381
        %s383 = sand.u32 %s270, 1
        %s384 = scalar_lea.vmem [#allocation3], %s383
        %p385 = scmp.lt.s32.totalorder %s30, 1
        %s386 = scalar_select %p385, %s30, 1
        %s387 = scalar_lea.vmem %s0, %s386
        %p388 = scmp.lt.s32.totalorder %s30, 1
        %s389 = scalar_select %p388, %s30, 1
        %p390 = scmp.lt.s32.totalorder %s31, 0
        %s391 = scalar_select %p390, %s31, 0
        %s392 = sadd.s32 %s391, %s389
        %s393 = smul.addr %s392, 8
        %s394 = scalar_lea.vmem %s1, %s393
        %v395 = vld [vmem:[%s387] sm:$0x1]
        %v396 = vld [vmem:[%s394] sm:$0xff]
        %v397 = vld [vmem:[%s3] sm:$0xff]
        %v398 = vld [vmem:[%s3 + $0x8] sm:$0xff]
        %v399 = vld [vmem:[%s3 + $0x10] sm:$0xff]
        %v400 = vld [vmem:[%s3 + $0x18] sm:$0xff]
        %v401 = vld [vmem:[%s3 + $0x20] sm:$0xff]
        %v402 = vld [vmem:[%s3 + $0x28] sm:$0xff]
        %v403 = vld [vmem:[%s3 + $0x30] sm:$0xff]
        %v404 = vld [vmem:[%s3 + $0x38] sm:$0xff]
        %v405 = vld [vmem:[%s4] sm:$0xff]
        %v406 = vld [vmem:[%s4 + $0x8] sm:$0xff]
        %v407 = vld [vmem:[%s4 + $0x10] sm:$0xff]
        %v408 = vld [vmem:[%s4 + $0x18] sm:$0xff]
        %v409 = vld [vmem:[%s4 + $0x20] sm:$0xff]
        %v410 = vld [vmem:[%s4 + $0x28] sm:$0xff]
        %v411 = vld [vmem:[%s4 + $0x30] sm:$0xff]
        %v412 = vld [vmem:[%s4 + $0x38] sm:$0xff]
        %v414 = vperm.slane %v395, 0
        %v416 = vmul.f32 %v405, %v414
        %v417 = vmul.f32 %v406, %v414
        %v418 = vmul.f32 %v407, %v414
        %v419 = vmul.f32 %v408, %v414
        %v420 = vmul.f32 %v409, %v414
        %v421 = vmul.f32 %v410, %v414
        %v422 = vmul.f32 %v411, %v414
        %v423 = vmul.f32 %v412, %v414
        %v424 = vadd.f32 %v397, %v416
        %v425 = vadd.f32 %v398, %v417
        %v426 = vadd.f32 %v399, %v418
        %v427 = vadd.f32 %v400, %v419
        %v428 = vadd.f32 %v401, %v420
        %v429 = vadd.f32 %v402, %v421
        %v430 = vadd.f32 %v403, %v422
        %v431 = vadd.f32 %v404, %v423
        %v432 = vld [vmem:[%s2] sm:$0xff]
        %v433 = vld [vmem:[%s2 + $0x8] sm:$0xff]
        %v434 = vld [vmem:[%s2 + $0x10] sm:$0xff]
        %v435 = vld [vmem:[%s2 + $0x18] sm:$0xff]
        %v436 = vld [vmem:[%s2 + $0x20] sm:$0xff]
        %v437 = vld [vmem:[%s2 + $0x28] sm:$0xff]
        %v438 = vld [vmem:[%s2 + $0x30] sm:$0xff]
        %v439 = vld [vmem:[%s2 + $0x38] sm:$0xff]
        %v440 = vmul.f32 %v432, %v414
        %v441 = vmul.f32 %v433, %v414
        %v442 = vmul.f32 %v434, %v414
        %v443 = vmul.f32 %v435, %v414
        %v444 = vmul.f32 %v436, %v414
        %v445 = vmul.f32 %v437, %v414
        %v446 = vmul.f32 %v438, %v414
        %v447 = vmul.f32 %v439, %v414
        %vm448 = vcmask 31744
        %v449 = vsel %vm448, %v440, 0.0
        %450 = vadd.xlane.f32.xlu0 %v449
        %v451 = vpop.xlane.xlu0 %450
        %v452 = vsel %vm448, %v441, 0.0
        %453 = vadd.xlane.f32.xlu0 %v452
        %v454 = vpop.xlane.xlu0 %453
        %v455 = vsel %vm448, %v442, 0.0
        %456 = vadd.xlane.f32.xlu0 %v455
        %v457 = vpop.xlane.xlu0 %456
        %v458 = vsel %vm448, %v443, 0.0
        %459 = vadd.xlane.f32.xlu0 %v458
        %v460 = vpop.xlane.xlu0 %459
        %v461 = vsel %vm448, %v444, 0.0
        %462 = vadd.xlane.f32.xlu0 %v461
        %v463 = vpop.xlane.xlu0 %462
        %v464 = vsel %vm448, %v445, 0.0
        %465 = vadd.xlane.f32.xlu0 %v464
        %v466 = vpop.xlane.xlu0 %465
        %v467 = vsel %vm448, %v446, 0.0
        %468 = vadd.xlane.f32.xlu0 %v467
        %v469 = vpop.xlane.xlu0 %468
        %v470 = vsel %vm448, %v447, 0.0
        %471 = vadd.xlane.f32.xlu0 %v470
        %v472 = vpop.xlane.xlu0 %471
        %v473 = vld [vmem:[%s5] sm:$0xff]
        %v474 = vld [vmem:[%s5 + $0x8] sm:$0xff]
        %v475 = vld [vmem:[%s5 + $0x10] sm:$0xff]
        %v476 = vld [vmem:[%s5 + $0x18] sm:$0xff]
        %v477 = vld [vmem:[%s5 + $0x20] sm:$0xff]
        %v478 = vld [vmem:[%s5 + $0x28] sm:$0xff]
        %v479 = vld [vmem:[%s5 + $0x30] sm:$0xff]
        %v480 = vld [vmem:[%s5 + $0x38] sm:$0xff]
        %v481 = vadd.f32 %v451, %v473
        %v482 = vadd.f32 %v454, %v474
        %v483 = vadd.f32 %v457, %v475
        %v484 = vadd.f32 %v460, %v476
        %v485 = vadd.f32 %v463, %v477
        %v486 = vadd.f32 %v466, %v478
        %v487 = vadd.f32 %v469, %v479
        %v488 = vadd.f32 %v472, %v480
        %490 = vset.pattern.permute.xlu0 0
        %491 = vperm.xlu0 %490, %v481
        %v492 = vpop.permute.xlu0 %491
        %495 = vset.pattern.permute.xlu0 0
        %496 = vperm.xlu0 %495, %v482
        %v497 = vpop.permute.xlu0 %496
        %500 = vset.pattern.permute.xlu0 0
        %501 = vperm.xlu0 %500, %v483
        %v502 = vpop.permute.xlu0 %501
        %505 = vset.pattern.permute.xlu0 0
        %506 = vperm.xlu0 %505, %v484
        %v507 = vpop.permute.xlu0 %506
        %510 = vset.pattern.permute.xlu0 0
        %511 = vperm.xlu0 %510, %v485
        %v512 = vpop.permute.xlu0 %511
        %515 = vset.pattern.permute.xlu0 0
        %516 = vperm.xlu0 %515, %v486
        %v517 = vpop.permute.xlu0 %516
        %520 = vset.pattern.permute.xlu0 0
        %521 = vperm.xlu0 %520, %v487
        %v522 = vpop.permute.xlu0 %521
        %525 = vset.pattern.permute.xlu0 0
        %526 = vperm.xlu0 %525, %v488
        %v527 = vpop.permute.xlu0 %526
        %v530 = vsel %vm448, %v424, 0
        %v533 = vsel %vm448, %v425, 0
        %v536 = vsel %vm448, %v426, 0
        %v539 = vsel %vm448, %v427, 0
        %v542 = vsel %vm448, %v428, 0
        %v545 = vsel %vm448, %v429, 0
        %v548 = vsel %vm448, %v430, 0
        %v551 = vsel %vm448, %v431, 0
        %v554 = vsel %vm448, %v396, 0
        %556 = vmatpush.xpose.msra.mxu0 0.0
        %557 = vmatpush.xpose.msra.mxu0 0.0
        %558 = vmatpush.xpose.msra.mxu0 0.0
        %559 = vmatpush.xpose.msra.mxu0 0.0
        %560 = vmatpush.xpose.msra.mxu0 0.0
        %561 = vmatpush.xpose.msra.mxu0 0.0
        %562 = vmatpush.xpose.msra.mxu0 0.0
        %563 = vmatpush.xpose.msra.mxu0 0.0
        %564 = vmatpush.xpose.msra.mxu0 0.0
        %565 = vmatpush.xpose.msra.mxu0 0.0
        %566 = vmatpush.xpose.msra.mxu0 0.0
        %567 = vmatpush.xpose.msra.mxu0 0.0
        %568 = vmatpush.xpose.msra.mxu0 0.0
        %569 = vmatpush.xpose.msra.mxu0 0.0
        %570 = vmatpush.xpose.msra.mxu0 0.0
        %571 = vmatpush.xpose.msra.mxu0 %v554
        %572 = vmatmul.f32.gmra.mxu0 %v530
        %v573 = vpop.f32.mrf.mxu0
        %v574 = vadd.f32 %v492, %v573
        %575 = vmatmul.f32.gmra.mxu0 %v533
        %v576 = vpop.f32.mrf.mxu0
        %v577 = vadd.f32 %v497, %v576
        %578 = vmatmul.f32.gmra.mxu0 %v536
        %v579 = vpop.f32.mrf.mxu0
        %v580 = vadd.f32 %v502, %v579
        %581 = vmatmul.f32.gmra.mxu0 %v539
        %v582 = vpop.f32.mrf.mxu0
        %v583 = vadd.f32 %v507, %v582
        %584 = vmatmul.f32.gmra.mxu0 %v542
        %v585 = vpop.f32.mrf.mxu0
        %v586 = vadd.f32 %v512, %v585
        %587 = vmatmul.f32.gmra.mxu0 %v545
        %v588 = vpop.f32.mrf.mxu0
        %v589 = vadd.f32 %v517, %v588
        %590 = vmatmul.f32.gmra.mxu0 %v548
        %v591 = vpop.f32.mrf.mxu0
        %v592 = vadd.f32 %v522, %v591
        %593 = vmatmul.f32.gmra.mxu0 %v551
        %v594 = vpop.f32.mrf.mxu0
        %v595 = vadd.f32 %v527, %v594
        %596 = vdwg.mxu0
        %v597 = vxor.u32 %v574, 2147483648
        %v598 = vxor.u32 %v577, 2147483648
        %v599 = vxor.u32 %v580, 2147483648
        %v600 = vxor.u32 %v583, 2147483648
        %v601 = vxor.u32 %v586, 2147483648
        %v602 = vxor.u32 %v589, 2147483648
        %v603 = vxor.u32 %v592, 2147483648
        %v604 = vxor.u32 %v595, 2147483648
        %v605 = vmul.f32 %v597, 1.442695
        %v606 = vpow.pop %v605
        %v607 = vmul.f32 %v598, 1.442695
        %v608 = vpow.pop %v607
        %v609 = vmul.f32 %v599, 1.442695
        %v610 = vpow.pop %v609
        %v611 = vmul.f32 %v600, 1.442695
        %v612 = vpow.pop %v611
        %v613 = vmul.f32 %v601, 1.442695
        %v614 = vpow.pop %v613
        %v615 = vmul.f32 %v602, 1.442695
        %v616 = vpow.pop %v615
        %v617 = vmul.f32 %v603, 1.442695
        %v618 = vpow.pop %v617
        %v619 = vmul.f32 %v604, 1.442695
        %v620 = vpow.pop %v619
        %v621 = vadd.f32 %v606, 1.0
        %v622 = vadd.f32 %v608, 1.0
        %v623 = vadd.f32 %v610, 1.0
        %v624 = vadd.f32 %v612, 1.0
        %v625 = vadd.f32 %v614, 1.0
        %v626 = vadd.f32 %v616, 1.0
        %v627 = vadd.f32 %v618, 1.0
        %v628 = vadd.f32 %v620, 1.0
        %v629 = vrcp.pop %v621
        %v630 = vmul.f32 %v621, %v629
        %v631 = vsub.f32 1.0, %v630
        %v632 = vmul.f32 %v629, %v631
        %v633 = vadd.f32 %v629, %v632
        %vm634 = vweird.f32 %v621
        %vm635 = vweird.f32 %v629
        %vm636 = vmor %vm634, %vm635
        %v637 = vsel %vm636, %v629, %v633
        %v638 = vand.u32 2147483647, %v621
        %vm639 = vcmp.eq.f32.partialorder %v638, 8.507059e+37
        %v640 = vand.u32 %v621, 2147483648
        %v641 = vor.u32 1.1754944e-38, %v640
        %v642 = vsel %vm639, %v641, %v637
        %v643 = vmul.f32 1.0, %v642
        %v644 = vrcp.pop %v622
        %v645 = vmul.f32 %v622, %v644
        %v646 = vsub.f32 1.0, %v645
        %v647 = vmul.f32 %v644, %v646
        %v648 = vadd.f32 %v644, %v647
        %vm649 = vweird.f32 %v622
        %vm650 = vweird.f32 %v644
        %vm651 = vmor %vm649, %vm650
        %v652 = vsel %vm651, %v644, %v648
        %v653 = vand.u32 2147483647, %v622
        %vm654 = vcmp.eq.f32.partialorder %v653, 8.507059e+37
        %v655 = vand.u32 %v622, 2147483648
        %v656 = vor.u32 1.1754944e-38, %v655
        %v657 = vsel %vm654, %v656, %v652
        %v658 = vmul.f32 1.0, %v657
        %v659 = vrcp.pop %v623
        %v660 = vmul.f32 %v623, %v659
        %v661 = vsub.f32 1.0, %v660
        %v662 = vmul.f32 %v659, %v661
        %v663 = vadd.f32 %v659, %v662
        %vm664 = vweird.f32 %v623
        %vm665 = vweird.f32 %v659
        %vm666 = vmor %vm664, %vm665
        %v667 = vsel %vm666, %v659, %v663
        %v668 = vand.u32 2147483647, %v623
        %vm669 = vcmp.eq.f32.partialorder %v668, 8.507059e+37
        %v670 = vand.u32 %v623, 2147483648
        %v671 = vor.u32 1.1754944e-38, %v670
        %v672 = vsel %vm669, %v671, %v667
        %v673 = vmul.f32 1.0, %v672
        %v674 = vrcp.pop %v624
        %v675 = vmul.f32 %v624, %v674
        %v676 = vsub.f32 1.0, %v675
        %v677 = vmul.f32 %v674, %v676
        %v678 = vadd.f32 %v674, %v677
        %vm679 = vweird.f32 %v624
        %vm680 = vweird.f32 %v674
        %vm681 = vmor %vm679, %vm680
        %v682 = vsel %vm681, %v674, %v678
        %v683 = vand.u32 2147483647, %v624
        %vm684 = vcmp.eq.f32.partialorder %v683, 8.507059e+37
        %v685 = vand.u32 %v624, 2147483648
        %v686 = vor.u32 1.1754944e-38, %v685
        %v687 = vsel %vm684, %v686, %v682
        %v688 = vmul.f32 1.0, %v687
        %v689 = vrcp.pop %v625
        %v690 = vmul.f32 %v625, %v689
        %v691 = vsub.f32 1.0, %v690
        %v692 = vmul.f32 %v689, %v691
        %v693 = vadd.f32 %v689, %v692
        %vm694 = vweird.f32 %v625
        %vm695 = vweird.f32 %v689
        %vm696 = vmor %vm694, %vm695
        %v697 = vsel %vm696, %v689, %v693
        %v698 = vand.u32 2147483647, %v625
        %vm699 = vcmp.eq.f32.partialorder %v698, 8.507059e+37
        %v700 = vand.u32 %v625, 2147483648
        %v701 = vor.u32 1.1754944e-38, %v700
        %v702 = vsel %vm699, %v701, %v697
        %v703 = vmul.f32 1.0, %v702
        %v704 = vrcp.pop %v626
        %v705 = vmul.f32 %v626, %v704
        %v706 = vsub.f32 1.0, %v705
        %v707 = vmul.f32 %v704, %v706
        %v708 = vadd.f32 %v704, %v707
        %vm709 = vweird.f32 %v626
        %vm710 = vweird.f32 %v704
        %vm711 = vmor %vm709, %vm710
        %v712 = vsel %vm711, %v704, %v708
        %v713 = vand.u32 2147483647, %v626
        %vm714 = vcmp.eq.f32.partialorder %v713, 8.507059e+37
        %v715 = vand.u32 %v626, 2147483648
        %v716 = vor.u32 1.1754944e-38, %v715
        %v717 = vsel %vm714, %v716, %v712
        %v718 = vmul.f32 1.0, %v717
        %v719 = vrcp.pop %v627
        %v720 = vmul.f32 %v627, %v719
        %v721 = vsub.f32 1.0, %v720
        %v722 = vmul.f32 %v719, %v721
        %v723 = vadd.f32 %v719, %v722
        %vm724 = vweird.f32 %v627
        %vm725 = vweird.f32 %v719
        %vm726 = vmor %vm724, %vm725
        %v727 = vsel %vm726, %v719, %v723
        %v728 = vand.u32 2147483647, %v627
        %vm729 = vcmp.eq.f32.partialorder %v728, 8.507059e+37
        %v730 = vand.u32 %v627, 2147483648
        %v731 = vor.u32 1.1754944e-38, %v730
        %v732 = vsel %vm729, %v731, %v727
        %v733 = vmul.f32 1.0, %v732
        %v734 = vrcp.pop %v628
        %v735 = vmul.f32 %v628, %v734
        %v736 = vsub.f32 1.0, %v735
        %v737 = vmul.f32 %v734, %v736
        %v738 = vadd.f32 %v734, %v737
        %vm739 = vweird.f32 %v628
        %vm740 = vweird.f32 %v734
        %vm741 = vmor %vm739, %vm740
        %v742 = vsel %vm741, %v734, %v738
        %v743 = vand.u32 2147483647, %v628
        %vm744 = vcmp.eq.f32.partialorder %v743, 8.507059e+37
        %v745 = vand.u32 %v628, 2147483648
        %v746 = vor.u32 1.1754944e-38, %v745
        %v747 = vsel %vm744, %v746, %v742
        %v748 = vmul.f32 1.0, %v747
        %v749 = vld [vmem:[%s6] sm:$0xff]
        %v750 = vld [vmem:[%s6 + $0x8] sm:$0xff]
        %v751 = vld [vmem:[%s6 + $0x10] sm:$0xff]
        %v752 = vld [vmem:[%s6 + $0x18] sm:$0xff]
        %v753 = vld [vmem:[%s7] sm:$0xff]
        %v754 = vld [vmem:[%s7 + $0x8] sm:$0xff]
        %v755 = vld [vmem:[%s7 + $0x10] sm:$0xff]
        %v756 = vld [vmem:[%s7 + $0x18] sm:$0xff]
        %758 = vset.pattern.permute.xlu0 0
        %759 = vperm.xlu0 %758, %v753
        %v760 = vpop.permute.xlu0 %759
        %763 = vset.pattern.permute.xlu0 0
        %764 = vperm.xlu0 %763, %v754
        %v765 = vpop.permute.xlu0 %764
        %768 = vset.pattern.permute.xlu0 0
        %769 = vperm.xlu0 %768, %v755
        %v770 = vpop.permute.xlu0 %769
        %773 = vset.pattern.permute.xlu0 0
        %774 = vperm.xlu0 %773, %v756
        %v775 = vpop.permute.xlu0 %774
        %vm777 = vcmask 523264
        %v779 = vsel %vm777, %v749, 0
        %v782 = vsel %vm777, %v750, 0
        %v785 = vsel %vm777, %v751, 0
        %v788 = vsel %vm777, %v752, 0
        %790 = vmatpush.msra.mxu0 0.0
        %791 = vmatpush.msra.mxu0 0.0
        %792 = vmatpush.msra.mxu0 0.0
        %793 = vmatpush.msra.mxu0 0.0
        %794 = vmatpush.msra.mxu0 0.0
        %795 = vmatpush.msra.mxu0 0.0
        %796 = vmatpush.msra.mxu0 0.0
        %797 = vmatpush.msra.mxu0 0.0
        %798 = vmatpush.msra.mxu0 %v748
        %799 = vmatpush.msra.mxu0 %v733
        %800 = vmatpush.msra.mxu0 %v718
        %801 = vmatpush.msra.mxu0 %v703
        %802 = vmatpush.msra.mxu0 %v688
        %803 = vmatpush.msra.mxu0 %v673
        %804 = vmatpush.msra.mxu0 %v658
        %805 = vmatpush.msra.mxu0 %v643
        %806 = vmatmul.f32.gmra.mxu0 %v779
        %v807 = vpop.f32.mrf.mxu0
        %v808 = vadd.f32 %v760, %v807
        %809 = vmatmul.f32.gmra.mxu0 %v782
        %v810 = vpop.f32.mrf.mxu0
        %v811 = vadd.f32 %v765, %v810
        %812 = vmatmul.f32.gmra.mxu0 %v785
        %v813 = vpop.f32.mrf.mxu0
        %v814 = vadd.f32 %v770, %v813
        %815 = vmatmul.f32.gmra.mxu0 %v788
        %v816 = vpop.f32.mrf.mxu0
        %v817 = vadd.f32 %v775, %v816
        %818 = vdwg.mxu0
        %v819 = vxor.u32 %v808, 2147483648
        %v820 = vxor.u32 %v811, 2147483648
        %v821 = vxor.u32 %v814, 2147483648
        %v822 = vxor.u32 %v817, 2147483648
        %v823 = vmul.f32 %v819, 1.442695
        %v824 = vpow.pop %v823
        %v825 = vmul.f32 %v820, 1.442695
        %v826 = vpow.pop %v825
        %v827 = vmul.f32 %v821, 1.442695
        %v828 = vpow.pop %v827
        %v829 = vmul.f32 %v822, 1.442695
        %v830 = vpow.pop %v829
        %v831 = vadd.f32 %v824, 1.0
        %v832 = vadd.f32 %v826, 1.0
        %v833 = vadd.f32 %v828, 1.0
        %v834 = vadd.f32 %v830, 1.0
        %v835 = vrcp.pop %v831
        %v836 = vmul.f32 %v831, %v835
        %v837 = vsub.f32 1.0, %v836
        %v838 = vmul.f32 %v835, %v837
        %v839 = vadd.f32 %v835, %v838
        %vm840 = vweird.f32 %v831
        %vm841 = vweird.f32 %v835
        %vm842 = vmor %vm840, %vm841
        %v843 = vsel %vm842, %v835, %v839
        %v844 = vand.u32 2147483647, %v831
        %vm845 = vcmp.eq.f32.partialorder %v844, 8.507059e+37
        %v846 = vand.u32 %v831, 2147483648
        %v847 = vor.u32 1.1754944e-38, %v846
        %v848 = vsel %vm845, %v847, %v843
        %v849 = vmul.f32 1.0, %v848
        %v850 = vrcp.pop %v832
        %v851 = vmul.f32 %v832, %v850
        %v852 = vsub.f32 1.0, %v851
        %v853 = vmul.f32 %v850, %v852
        %v854 = vadd.f32 %v850, %v853
        %vm855 = vweird.f32 %v832
        %vm856 = vweird.f32 %v850
        %vm857 = vmor %vm855, %vm856
        %v858 = vsel %vm857, %v850, %v854
        %v859 = vand.u32 2147483647, %v832
        %vm860 = vcmp.eq.f32.partialorder %v859, 8.507059e+37
        %v861 = vand.u32 %v832, 2147483648
        %v862 = vor.u32 1.1754944e-38, %v861
        %v863 = vsel %vm860, %v862, %v858
        %v864 = vmul.f32 1.0, %v863
        %v865 = vrcp.pop %v833
        %v866 = vmul.f32 %v833, %v865
        %v867 = vsub.f32 1.0, %v866
        %v868 = vmul.f32 %v865, %v867
        %v869 = vadd.f32 %v865, %v868
        %vm870 = vweird.f32 %v833
        %vm871 = vweird.f32 %v865
        %vm872 = vmor %vm870, %vm871
        %v873 = vsel %vm872, %v865, %v869
        %v874 = vand.u32 2147483647, %v833
        %vm875 = vcmp.eq.f32.partialorder %v874, 8.507059e+37
        %v876 = vand.u32 %v833, 2147483648
        %v877 = vor.u32 1.1754944e-38, %v876
        %v878 = vsel %vm875, %v877, %v873
        %v879 = vmul.f32 1.0, %v878
        %v880 = vrcp.pop %v834
        %v881 = vmul.f32 %v834, %v880
        %v882 = vsub.f32 1.0, %v881
        %v883 = vmul.f32 %v880, %v882
        %v884 = vadd.f32 %v880, %v883
        %vm885 = vweird.f32 %v834
        %vm886 = vweird.f32 %v880
        %vm887 = vmor %vm885, %vm886
        %v888 = vsel %vm887, %v880, %v884
        %v889 = vand.u32 2147483647, %v834
        %vm890 = vcmp.eq.f32.partialorder %v889, 8.507059e+37
        %v891 = vand.u32 %v834, 2147483648
        %v892 = vor.u32 1.1754944e-38, %v891
        %v893 = vsel %vm890, %v892, %v888
        %v894 = vmul.f32 1.0, %v893
        %v895 = vld [vmem:[%s8] sm:$0x1]
        %v896 = vld [vmem:[#allocation2] sm:$0x1]
        %898 = vset.pattern.permute.xlu0 0
        %899 = vperm.xlu0 %898, %v896
        %v900 = vpop.permute.xlu0 %899
        %v902 = vperm.slane %v900, 0
        %vm903 = vcmask 261120
        %v905 = vsel %vm903, %v895, 0
        %907 = vmatpush.msra.mxu0 0.0
        %908 = vmatpush.msra.mxu0 0.0
        %909 = vmatpush.msra.mxu0 0.0
        %910 = vmatpush.msra.mxu0 0.0
        %911 = vmatpush.msra.mxu0 0.0
        %912 = vmatpush.msra.mxu0 0.0
        %913 = vmatpush.msra.mxu0 0.0
        %914 = vmatpush.msra.mxu0 0.0
        %915 = vmatpush.msra.mxu0 0.0
        %916 = vmatpush.msra.mxu0 0.0
        %917 = vmatpush.msra.mxu0 0.0
        %918 = vmatpush.msra.mxu0 0.0
        %919 = vmatpush.msra.mxu0 %v894
        %920 = vmatpush.msra.mxu0 %v879
        %921 = vmatpush.msra.mxu0 %v864
        %922 = vmatpush.msra.mxu0 %v849
        %923 = vmatmul.f32.gmra.mxu0 %v905
        %v924 = vpop.f32.mrf.mxu0
        %v925 = vadd.f32 %v902, %v924
        %926 = vdwg.mxu0
        %vm927 = vcmask 57344
        %928 = vst.msk [vmem:[%s384] sm:$0x1] %vm927, %v925
        %s929 = sand.u32 %s270, 1
        %s930 = scalar_lea.sflag [#allocation4], %s929
        %s931 = sand.u32 %s270, 1
        %s932 = scalar_lea.vmem [#allocation3], %s931
        // Predicated region
        $region61: #{tpu_custom_call.1} parent=59 // pred_check
          %p933 = pneg %p280
        $region62: #{tpu_custom_call.1} parent=59 // pred_check_branch
          %935 = sbr.rel (%p933) target = $region64
        $region63: #{tpu_custom_call.1} parent=59 // pred_region
          %937 = vsyncadd %s930, 0
          %s938 = sadd.s32 %s31, %s30
          %s939 = scalar_lea.hbm %s10, %s938
          %s941 = sshll.u32 %s932, 4
          %s942 = int_to_ptr.vmem [resolvable:$true] %s941
          %s943 = sshll.u32 %s939, 4
          %s944 = int_to_ptr.hbm [resolvable:$true] %s943
          %946 = dma.vmem_to_hbm [thread:$0]  %s942, 16, %s944, %s930
        $region64: #{tpu_custom_call.1} parent=59 // pred_fallthru
          _
      $region60: #{tpu_custom_call.1} parent=5 // pred_fallthru
        _
      %p947 = scmp.le.s32.totalorder 2, %s21
      // Predicated region
      $region65: #{tpu_custom_call.1} parent=5 // pred_check
        %p948 = pneg %p947
      $region66: #{tpu_custom_call.1} parent=5 // pred_check_branch
        %950 = sbr.rel (%p948) target = $region68
      $region67: #{tpu_custom_call.1} parent=5 // pred_region
        %s951 = ssub.s32 %s21, 2
        // Predicated region
        $region69: #{tpu_custom_call.1} parent=67 // pred_check
          %p952 = pneg %p286
        $region70: #{tpu_custom_call.1} parent=67 // pred_check_branch
          %954 = sbr.rel (%p952) target = $region72
        $region71: #{tpu_custom_call.1} parent=67 // pred_region
          %s955 = sand.u32 %s271, 1
          %s956 = scalar_lea.sflag [#allocation4], %s955
          %s957 = sand.u32 %s271, 1
          %s958 = scalar_lea.vmem [#allocation3], %s957
          %960 = dma.done %s956, 16
        $region72: #{tpu_custom_call.1} parent=67 // pred_fallthru
          _
      $region68: #{tpu_custom_call.1} parent=5 // pred_fallthru
        _
    $region6: #{tpu_custom_call.1} parent=1 // loop_footer
      %s25 = sadd.s32 1, %s21
    $region7: #{tpu_custom_call.1} parent=1 // loop_footer_branch
      %20 = sbr.rel target = $region3
    $region8: #{tpu_custom_call.1} parent=1 // loop_exit
      _
    %961 = vsyncpa [#allocation4], 1
    %s962 = scalar_lea.sflag [#allocation4], 1
    %963 = vsyncpa %s962, 1

</llo_original>
